<compile_context>
chip_gen: v6e
topology: v6e:2x2x1
jax: 0.10.0
libtpu: 0.0.40
codegen_flags: <defaults>
</compile_context>

<pallas_src>
import numpy as np
import jax
import jax.numpy as jnp
from jax.experimental import pallas as pl
from jax.experimental.pallas import tpu as pltpu

C1 = 16   # conv1 out channels
C2 = 32   # conv2 out channels
H1 = 64   # fc1 hidden width
K = 3     # conv kernel size (padding=1)


def cnn_kernel(x_ref, w1b_ref, b1_ref, w2b_ref, b2_ref,
               wf_ref, bf_ref, wo_ref, bo_ref, out_ref):
    """One batch tile: x (TB, L) -> out (TB, 1). All intermediates lane-dense."""
    x = x_ref[...]                                              # (TB, L) f32

    # conv1 + ReLU as a banded matmul: (TB, L) x (L, 16L) -> (TB, 16L)
    h1 = jnp.dot(x, w1b_ref[...], preferred_element_type=jnp.float32)
    h1 = jnp.maximum(h1 + b1_ref[...], 0.0)

    # conv2 + ReLU as a banded matmul: (TB, 16L) x (16L, 32L) -> (TB, 32L)
    # (already in channels-last flattened order -> no reshape/transpose needed)
    h2 = jnp.dot(h1, w2b_ref[...], preferred_element_type=jnp.float32)
    h2 = jnp.maximum(h2 + b2_ref[...], 0.0)

    # fc1 + ReLU: (TB, 32L) x (32L, 64) -> (TB, 64)
    h3 = jnp.dot(h2, wf_ref[...], preferred_element_type=jnp.float32)
    h3 = jnp.maximum(h3 + bf_ref[...], 0.0)

    # out + sigmoid: 1-wide output -> VPU multiply + lane reduce (skip the MXU)
    logits = jnp.sum(h3 * wo_ref[...], axis=-1, keepdims=True) + bo_ref[...]
    out_ref[...] = jax.nn.sigmoid(logits)                       # (TB, 1)


def _round_up(n, m):
    return ((n + m - 1) // m) * m


def _pick_batch_tile(batch):
    if batch <= 8:
        return batch                      # one tiny tile (block == full array)
    # >=2 grid steps so v7x's two TensorCores both get work; <=512 rows keeps
    # per-tile VMEM bounded while amortizing per-step overhead and filling the
    # MXU M dimension.
    return int(min(512, _round_up(pl.cdiv(batch, 2), 8)))


def _vmem_limit_bytes(tb, length):
    f32 = 4
    weights = (length * length * C1                 # W1b
               + length * C1 * length * C2          # W2b
               + length * C2 * H1                   # wf
               + length * C1 + length * C2 + H1 + H1 + 2) * f32
    acts = tb * (length + length * C1 + length * C2 + H1 + 1) * f32
    io = 2 * tb * (length + 1) * f32                # double-buffered x / out tiles
    est = 2 * weights + acts + io                   # resident weights double-buffered by default
    return int(min(100 * 2**20, max(32 * 2**20, 2 * est)))


def cnn_forward(x, params):
    """x: (B, input_dim) float32.  params: kernel-layout weights from init_params."""
    batch, length = x.shape
    tb = _pick_batch_tile(batch)
    grid = (pl.cdiv(batch, tb),)

    args = (x,
            params['w1b'], params['b1'],
            params['w2b'], params['b2'],
            params['wf'], params['bf'],
            params['wo'], params['bo'])

    # x / out tiled over batch; weights resident (same block every grid step).
    x_spec = pl.BlockSpec((tb, length), lambda i: (i, 0))
    out_spec = pl.BlockSpec((tb, 1), lambda i: (i, 0))

    def resident_spec(w):
        nd = w.ndim
        return pl.BlockSpec(w.shape, lambda i, nd=nd: (0,) * nd)

    in_specs = [x_spec] + [resident_spec(a) for a in args[1:]]

    # TODO(synk): for input_dim >~ 256 the banded W2b (16L x 32L) stops paying;
    # switch conv2 back to shifted matmuls built with pltpu.roll + an iota edge
    # mask, K-tile fc1 over a reduction grid axis with an f32 accumulator, and
    # single-buffer resident weights (pipeline_mode=pl.Buffered(1)) / bf16-cast
    # wf to bound VMEM on v7x.
    return pl.pallas_call(
        cnn_kernel,
        out_shape=jax.ShapeDtypeStruct((batch, 1), jnp.float32),
        grid=grid,
        in_specs=in_specs,
        out_specs=out_spec,
        compiler_params=pltpu.CompilerParams(
            dimension_semantics=("parallel",),
            vmem_limit_bytes=_vmem_limit_bytes(tb, length)),
    )(*args)


def init_params(input_dim, key):
    """Deterministic init in torch-native shapes, then one-time kernel-layout build."""
    L = input_dim
    ks = jax.random.split(key, 8)
    # torch-shaped parameters
    w1_t = jax.random.normal(ks[0], (C1, 1, K), jnp.float32) * 0.1   # (16,1,3)
    b1_t = jax.random.normal(ks[1], (C1,), jnp.float32) * 0.1
    w2_t = jax.random.normal(ks[2], (C2, C1, K), jnp.float32) * 0.1  # (32,16,3)
    b2_t = jax.random.normal(ks[3], (C2,), jnp.float32) * 0.1
    wf_t = jax.random.normal(ks[4], (H1, C2 * L), jnp.float32) * 0.05
    bf_t = jax.random.normal(ks[5], (H1,), jnp.float32) * 0.05
    wo_t = jax.random.normal(ks[6], (1, H1), jnp.float32) * 0.05
    bo_t = jax.random.normal(ks[7], (1,), jnp.float32) * 0.05

    w1 = np.asarray(w1_t)
    w2 = np.asarray(w2_t)

    # conv1 folded into a block-banded dense weight (channels-last flatten l*16+co):
    #   h1_flat[b, l*16+co] = sum_k x[b, l+k-1] * w1[co, 0, k]   (zero outside [0, L))
    w1b = np.zeros((L, L * C1), np.float32)
    for l in range(L):
        for k in range(K):
            j = l + k - 1
            if 0 <= j < L:
                w1b[j, l * C1:(l + 1) * C1] = w1[:, 0, k]

    # conv2 folded likewise:
    #   h2_flat[b, l*32+co] = sum_{ci,k} h1_flat[b, (l+k-1)*16+ci] * w2[co, ci, k]
    w2b = np.zeros((L * C1, L * C2), np.float32)
    for l in range(L):
        for k in range(K):
            j = l + k - 1
            if 0 <= j < L:
                w2b[j * C1:(j + 1) * C1, l * C2:(l + 1) * C2] = w2[:, :, k].T

    # channels-last flatten index is l*C2 + c; torch's view index is c*L + l
    #   => WF[l*C2 + c, h] = wf_t[h, c*L + l]
    wf = jnp.transpose(wf_t.reshape(H1, C2, L), (2, 1, 0)).reshape(L * C2, H1)

    params = dict(
        w1b=jnp.asarray(w1b),                        # (L, 16L)
        b1=jnp.tile(b1_t, L).reshape(1, L * C1),     # (1, 16L)  index l*16+co
        w2b=jnp.asarray(w2b),                        # (16L, 32L)
        b2=jnp.tile(b2_t, L).reshape(1, L * C2),     # (1, 32L)  index l*32+co
        wf=wf,                                       # (32L, 64)
        bf=bf_t.reshape(1, H1),                      # (1, 64)
        wo=wo_t,                                     # (1, 64)
        bo=bo_t.reshape(1, 1),                       # (1, 1)
    )
    torch_params = dict(w1=w1_t, b1=b1_t, w2=w2_t, b2=b2_t,
                        wf=wf_t, bf=bf_t, wo=wo_t, bo=bo_t)
    return params, torch_params


def reference_forward(x, tp):
    """Pure-JAX re-implementation of the PyTorch forward (NCW), for checking."""
    B, L = x.shape
    h = x[:, None, :]                                            # (B,1,L)
    h = jnp.pad(h, ((0, 0), (0, 0), (1, 1)))
    h1 = jnp.stack([jnp.einsum('bcl,oc->bol', h[:, :, k:k + L], tp['w1'][:, :, k])
                    for k in range(K)], 0).sum(0) + tp['b1'][None, :, None]
    h1 = jnp.maximum(h1, 0.0)                                    # (B,16,L)
    hp = jnp.pad(h1, ((0, 0), (0, 0), (1, 1)))
    h2 = jnp.stack([jnp.einsum('bcl,oc->bol', hp[:, :, k:k + L], tp['w2'][:, :, k])
                    for k in range(K)], 0).sum(0) + tp['b2'][None, :, None]
    h2 = jnp.maximum(h2, 0.0)                                    # (B,32,L)
    flat = h2.reshape(B, -1)                                     # torch view order
    h3 = jnp.maximum(flat @ tp['wf'].T + tp['bf'], 0.0)
    return jax.nn.sigmoid(h3 @ tp['wo'].T + tp['bo'])


if __name__ == "__main__":
    input_dim = 16
    batch = 32                                    # exercises a 2-step batch grid
    key = jax.random.PRNGKey(0)
    kx, kp = jax.random.split(key)
    x = jax.random.normal(kx, (batch, input_dim), jnp.float32)

    params, torch_params = init_params(input_dim, kp)

    out = jax.block_until_ready(cnn_forward(x, params))
    ref = jax.block_until_ready(reference_forward(x, torch_params))

    assert out.shape == (batch, 1)
    np.testing.assert_allclose(np.asarray(out), np.asarray(ref), rtol=1e-5, atol=1e-5)
    print("KERNEL_OK")
</pallas_src>

<mosaic_0001>
module attributes {stable_mosaic.version = 11 : i64} {
  func.func @cnn_kernel(%arg0: i32, %arg1: memref<16x16xf32, #tpu.memory_space<vmem>>, %arg2: memref<16x256xf32, #tpu.memory_space<vmem>>, %arg3: memref<1x256xf32, #tpu.memory_space<vmem>>, %arg4: memref<256x512xf32, #tpu.memory_space<vmem>>, %arg5: memref<1x512xf32, #tpu.memory_space<vmem>>, %arg6: memref<512x64xf32, #tpu.memory_space<vmem>>, %arg7: memref<1x64xf32, #tpu.memory_space<vmem>>, %arg8: memref<1x64xf32, #tpu.memory_space<vmem>>, %arg9: memref<1x1xf32, #tpu.memory_space<vmem>>, %arg10: memref<16x1xf32, #tpu.memory_space<vmem>>) attributes {dimension_semantics = [#tpu.dimension_semantics<parallel>], iteration_bounds = array<i64: 2>, scalar_prefetch = 0 : i64, scratch_operands = 0 : i64, tpu.core_type = #tpu.core_type<tc>, window_params = [{transform_indices = @transform_0, window_bounds = array<i64: 16, 16>}, {pipeline_mode = #tpu.pipeline_mode<synchronous>, transform_indices = @transform_1, window_bounds = array<i64: 16, 256>}, {pipeline_mode = #tpu.pipeline_mode<synchronous>, transform_indices = @transform_2, window_bounds = array<i64: 1, 256>}, {pipeline_mode = #tpu.pipeline_mode<synchronous>, transform_indices = @transform_3, window_bounds = array<i64: 256, 512>}, {pipeline_mode = #tpu.pipeline_mode<synchronous>, transform_indices = @transform_4, window_bounds = array<i64: 1, 512>}, {pipeline_mode = #tpu.pipeline_mode<synchronous>, transform_indices = @transform_5, window_bounds = array<i64: 512, 64>}, {pipeline_mode = #tpu.pipeline_mode<synchronous>, transform_indices = @transform_6, window_bounds = array<i64: 1, 64>}, {pipeline_mode = #tpu.pipeline_mode<synchronous>, transform_indices = @transform_7, window_bounds = array<i64: 1, 64>}, {pipeline_mode = #tpu.pipeline_mode<synchronous>, transform_indices = @transform_8, window_bounds = array<i64: 1, 1>}, {transform_indices = @transform_9, window_bounds = array<i64: 16, 1>}]} {
    %c0 = arith.constant 0 : index
    %c0_0 = arith.constant 0 : index
    %0 = vector.load %arg1[%c0, %c0_0] : memref<16x16xf32, #tpu.memory_space<vmem>>, vector<16x16xf32>
    %c0_1 = arith.constant 0 : index
    %c0_2 = arith.constant 0 : index
    %1 = vector.load %arg2[%c0_1, %c0_2] : memref<16x256xf32, #tpu.memory_space<vmem>>, vector<16x256xf32>
    %cst = arith.constant dense<0.000000e+00> : vector<16x256xf32>
    %2 = tpu.matmul %0, %1, %cst {dimension_numbers = #tpu.dot_dimension_numbers<[1], [0], [0], [1], [0, 0, 1, 1], [], []>} : vector<16x16xf32>, vector<16x256xf32>, vector<16x256xf32> -> vector<16x256xf32>
    %c0_3 = arith.constant 0 : index
    %c0_4 = arith.constant 0 : index
    %3 = vector.load %arg3[%c0_3, %c0_4] : memref<1x256xf32, #tpu.memory_space<vmem>>, vector<1x256xf32>
    %4 = vector.broadcast %3 : vector<1x256xf32> to vector<16x256xf32>
    %5 = arith.addf %2, %4 : vector<16x256xf32>
    %cst_5 = arith.constant 0.000000e+00 : f32
    %6 = vector.broadcast %cst_5 : f32 to vector<16x256xf32>
    %7 = arith.maximumf %5, %6 : vector<16x256xf32>
    %c0_6 = arith.constant 0 : index
    %c0_7 = arith.constant 0 : index
    %8 = vector.load %arg4[%c0_6, %c0_7] : memref<256x512xf32, #tpu.memory_space<vmem>>, vector<256x512xf32>
    %cst_8 = arith.constant dense<0.000000e+00> : vector<16x512xf32>
    %9 = tpu.matmul %7, %8, %cst_8 {dimension_numbers = #tpu.dot_dimension_numbers<[1], [0], [0], [1], [0, 0, 1, 1], [], []>} : vector<16x256xf32>, vector<256x512xf32>, vector<16x512xf32> -> vector<16x512xf32>
    %c0_9 = arith.constant 0 : index
    %c0_10 = arith.constant 0 : index
    %10 = vector.load %arg5[%c0_9, %c0_10] : memref<1x512xf32, #tpu.memory_space<vmem>>, vector<1x512xf32>
    %11 = vector.broadcast %10 : vector<1x512xf32> to vector<16x512xf32>
    %12 = arith.addf %9, %11 : vector<16x512xf32>
    %cst_11 = arith.constant 0.000000e+00 : f32
    %13 = vector.broadcast %cst_11 : f32 to vector<16x512xf32>
    %14 = arith.maximumf %12, %13 : vector<16x512xf32>
    %c0_12 = arith.constant 0 : index
    %c0_13 = arith.constant 0 : index
    %15 = vector.load %arg6[%c0_12, %c0_13] : memref<512x64xf32, #tpu.memory_space<vmem>>, vector<512x64xf32>
    %cst_14 = arith.constant dense<0.000000e+00> : vector<16x64xf32>
    %16 = tpu.matmul %14, %15, %cst_14 {dimension_numbers = #tpu.dot_dimension_numbers<[1], [0], [0], [1], [0, 0, 1, 1], [], []>} : vector<16x512xf32>, vector<512x64xf32>, vector<16x64xf32> -> vector<16x64xf32>
    %c0_15 = arith.constant 0 : index
    %c0_16 = arith.constant 0 : index
    %17 = vector.load %arg7[%c0_15, %c0_16] : memref<1x64xf32, #tpu.memory_space<vmem>>, vector<1x64xf32>
    %18 = vector.broadcast %17 : vector<1x64xf32> to vector<16x64xf32>
    %19 = arith.addf %16, %18 : vector<16x64xf32>
    %cst_17 = arith.constant 0.000000e+00 : f32
    %20 = vector.broadcast %cst_17 : f32 to vector<16x64xf32>
    %21 = arith.maximumf %19, %20 : vector<16x64xf32>
    %c0_18 = arith.constant 0 : index
    %c0_19 = arith.constant 0 : index
    %22 = vector.load %arg8[%c0_18, %c0_19] : memref<1x64xf32, #tpu.memory_space<vmem>>, vector<1x64xf32>
    %23 = vector.broadcast %22 : vector<1x64xf32> to vector<16x64xf32>
    %24 = arith.mulf %21, %23 : vector<16x64xf32>
    %cst_20 = arith.constant dense<0.000000e+00> : vector<16xf32>
    %25 = vector.multi_reduction <add>, %24, %cst_20 [1] : vector<16x64xf32> to vector<16xf32>
    %26 = vector.shape_cast %25 : vector<16xf32> to vector<16x1xf32>
    %c0_21 = arith.constant 0 : index
    %c0_22 = arith.constant 0 : index
    %27 = vector.load %arg9[%c0_21, %c0_22] : memref<1x1xf32, #tpu.memory_space<vmem>>, vector<1x1xf32>
    %28 = vector.broadcast %27 : vector<1x1xf32> to vector<16x1xf32>
    %29 = arith.addf %26, %28 : vector<16x1xf32>
    %30 = arith.negf %29 : vector<16x1xf32>
    %31 = math.exp %30 : vector<16x1xf32>
    %cst_23 = arith.constant 1.000000e+00 : f32
    %32 = vector.broadcast %cst_23 : f32 to vector<16x1xf32>
    %33 = arith.addf %32, %31 : vector<16x1xf32>
    %34 = arith.divf %32, %33 : vector<16x1xf32>
    %c0_24 = arith.constant 0 : index
    %c0_25 = arith.constant 0 : index
    %35 = vector.load %arg10[%c0_24, %c0_25] : memref<16x1xf32, #tpu.memory_space<vmem>>, vector<16x1xf32>
    tpu.vector_store %arg10[%c0_24, %c0_25], %34 {strides = array<i32>} : memref<16x1xf32, #tpu.memory_space<vmem>>, vector<16x1xf32>,
    return
  }
  func.func @transform_0(%arg0: i32) -> (i32, i32) {
    %c0_i32 = arith.constant 0 : i32
    %c0_i32_0 = arith.constant 0 : i32
    return %arg0, %c0_i32 : i32, i32
  }
  func.func @transform_1(%arg0: i32) -> (i32, i32) {
    %c0_i32 = arith.constant 0 : i32
    %c0_i32_0 = arith.constant 0 : i32
    %c0_i32_1 = arith.constant 0 : i32
    return %c0_i32, %c0_i32_0 : i32, i32
  }
  func.func @transform_2(%arg0: i32) -> (i32, i32) {
    %c0_i32 = arith.constant 0 : i32
    %c0_i32_0 = arith.constant 0 : i32
    %c0_i32_1 = arith.constant 0 : i32
    return %c0_i32, %c0_i32_0 : i32, i32
  }
  func.func @transform_3(%arg0: i32) -> (i32, i32) {
    %c0_i32 = arith.constant 0 : i32
    %c0_i32_0 = arith.constant 0 : i32
    %c0_i32_1 = arith.constant 0 : i32
    return %c0_i32, %c0_i32_0 : i32, i32
  }
  func.func @transform_4(%arg0: i32) -> (i32, i32) {
    %c0_i32 = arith.constant 0 : i32
    %c0_i32_0 = arith.constant 0 : i32
    %c0_i32_1 = arith.constant 0 : i32
    return %c0_i32, %c0_i32_0 : i32, i32
  }
  func.func @transform_5(%arg0: i32) -> (i32, i32) {
    %c0_i32 = arith.constant 0 : i32
    %c0_i32_0 = arith.constant 0 : i32
    %c0_i32_1 = arith.constant 0 : i32
    return %c0_i32, %c0_i32_0 : i32, i32
  }
  func.func @transform_6(%arg0: i32) -> (i32, i32) {
    %c0_i32 = arith.constant 0 : i32
    %c0_i32_0 = arith.constant 0 : i32
    %c0_i32_1 = arith.constant 0 : i32
    return %c0_i32, %c0_i32_0 : i32, i32
  }
  func.func @transform_7(%arg0: i32) -> (i32, i32) {
    %c0_i32 = arith.constant 0 : i32
    %c0_i32_0 = arith.constant 0 : i32
    %c0_i32_1 = arith.constant 0 : i32
    return %c0_i32, %c0_i32_0 : i32, i32
  }
  func.func @transform_8(%arg0: i32) -> (i32, i32) {
    %c0_i32 = arith.constant 0 : i32
    %c0_i32_0 = arith.constant 0 : i32
    %c0_i32_1 = arith.constant 0 : i32
    return %c0_i32, %c0_i32_0 : i32, i32
  }
  func.func @transform_9(%arg0: i32) -> (i32, i32) {
    %c0_i32 = arith.constant 0 : i32
    %c0_i32_0 = arith.constant 0 : i32
    return %arg0, %c0_i32 : i32, i32
  }
}

</mosaic_0001>

<llo_original>
// kernel: tpu_custom_call.1
$region0: #{tpu_custom_call.1}
  #allocation0 [shape = 'u32[]', space=smem, size = 0x4, offset = 0x4, fixed_abs, tag = 'smem constant byte address 0x4 - core index']
  #allocation1 [shape = 'u32[144,128]{1,0:T(1,128)}', space=vmem, size = 0x12000, scoped, tag = 'internal scratch']
  #allocation2 [shape = 'f32[1,1]{1,0:T(1,128)S(1)}', space=vmem, size = 0x200, scoped, tag = 'scoped memory for tpu_custom_call.1']
  %s0 = inlined_call_operand.vmem [shape: f32[32,16], index: 0, kind: input, shape index: {}]
  %s1 = inlined_call_operand.vmem [shape: f32[16,256], index: 1, kind: input, shape index: {}]
  %s2 = inlined_call_operand.vmem [shape: f32[1,256], index: 2, kind: input, shape index: {}]
  %s3 = inlined_call_operand.hbm [shape: f32[256,512], index: 3, kind: input, shape index: {}]
  %s4 = inlined_call_operand.vmem [shape: f32[1,512], index: 4, kind: input, shape index: {}]
  %s5 = inlined_call_operand.vmem [shape: f32[512,64], index: 5, kind: input, shape index: {}]
  %s6 = inlined_call_operand.vmem [shape: f32[1,64], index: 6, kind: input, shape index: {}]
  %s7 = inlined_call_operand.vmem [shape: f32[1,64], index: 7, kind: input, shape index: {}]
  %s8 = inlined_call_operand.<no memory space> [shape: f32[1,1], index: 8, kind: input, shape index: {}]
  %s9 = inlined_call_operand.vmem [shape: f32[32,1], index: 9, kind: output, shape index: {}]
  %s10 = sld [smem:[#allocation0]]
  $region73: #{tpu_custom_call.1} parent=0
    _
  %s12 = ssub.s32 1, %s10
  %s13 = scalar_select 0, %s12, %s10
  %v14 = vstv %s8
  %15 = vst [vmem:[#allocation2] sm:$0x1] %v14
  $region1: #{tpu_custom_call.1} parent=0
    #allocation3 [shape = 'u8[524288]{0}', space=vmem, size = 0x80000, scoped, tag = 'input window, operand 3, single buffered']
    #allocation4 [shape = 's32[2]{0}', space=sflag, size = 0x8, scoped, tag = 'scoped memory for tpu_custom_call.1']
    %16 = vsyncpa [#allocation4], 0
    loop: start=0, step=1, limit=4
    $region2: #{tpu_custom_call.1} parent=1 // loop_pre_header
      _
    $region3: #{tpu_custom_call.1} parent=1 // loop_header
      %s18 = sphi 0, %s22
      %p19 = scmp.ge.s32.totalorder %s18, 4
      %s28 = sphi 0, %s30
      %s31 = sphi 0, %s28
      %s32 = sphi 0, %s31
      %s48 = sphi 0, %s32
      %s52 = sphi 0, %s52
      %s54 = sphi 0, %s52
      %s55 = sphi 0, %s54
      %s69 = sphi 0, %s55
      %s73 = sphi 0, %s73
      %s75 = sphi 0, %s73
      %s76 = sphi 0, %s75
      %s90 = sphi 0, %s76
      %s94 = sphi 0, %s94
      %s96 = sphi 0, %s94
      %s97 = sphi 0, %s96
      %s111 = sphi 0, %s97
      %s115 = sphi 0, %s115
      %s117 = sphi 0, %s115
      %s118 = sphi 0, %s117
      %s132 = sphi 0, %s118
      %s136 = sphi 0, %s136
      %s138 = sphi 0, %s136
      %s139 = sphi 0, %s138
      %s153 = sphi 0, %s139
      %s157 = sphi 0, %s157
      %s159 = sphi 0, %s157
      %s160 = sphi 0, %s159
      %s174 = sphi 0, %s160
      %s178 = sphi 0, %s178
      %s180 = sphi 0, %s178
      %s181 = sphi 0, %s180
      %s195 = sphi 0, %s181
      %s199 = sphi 0, %s199
      %s201 = sphi 0, %s199
      %s202 = sphi 0, %s201
      %s216 = sphi 0, %s202
      %s222 = sphi 0, %s224
      %s225 = sphi 0, %s222
      %s226 = sphi 0, %s225
      %s242 = sphi 0, %s226
    $region4: #{tpu_custom_call.1} parent=1 // loop_header_branch
      %21 = sbr.rel (%p19) target = $region8
    $region5: #{tpu_custom_call.1} parent=1 // loop_body
      %s23 = ssub.s32 %s18, 1
      %s24 = ssub.s32 %s18, 2
      %s25 = sadd.s32 %s18, 1
      %s26 = ssub.s32 %s18, %s25
      %p27 = scmp.eq.s32.totalorder %s26, 0
      %s29 = sadd.s32 %s28, 1
      %s30 = scalar_select %p27, %s28, %s29
      %p33 = pneg %p27
      %p34 = scmp.eq.s32.totalorder %s18, 1
      %p35 = por %p33, %p34
      %p36 = scmp.ne.s32.totalorder %s28, %s31
      %p37 = scmp.eq.s32.totalorder %s18, 0
      %p38 = por %p36, %p37
      %p39 = scmp.ne.s32.totalorder %s28, %s31
      %p40 = scmp.eq.s32.totalorder %s23, 1
      %p41 = por %p39, %p40
      %p42 = scmp.ne.s32.totalorder %s31, %s32
      %p43 = scmp.eq.s32.totalorder %s23, 0
      %p44 = por %p42, %p43
      %p45 = scmp.ne.s32.totalorder %s31, %s32
      %p46 = scmp.eq.s32.totalorder %s24, 1
      %p47 = por %p45, %p46
      %p49 = scmp.ne.s32.totalorder %s32, %s48
      %p50 = scmp.eq.s32.totalorder %s24, 0
      %p51 = por %p49, %p50
      %s53 = sadd.s32 %s52, 1
      %p56 = scmp.eq.s32.totalorder %s18, 1
      %p57 = scmp.ne.s32.totalorder %s52, %s54
      %p58 = scmp.eq.s32.totalorder %s18, 0
      %p59 = por %p57, %p58
      %p60 = scmp.ne.s32.totalorder %s52, %s54
      %p61 = scmp.eq.s32.totalorder %s23, 1
      %p62 = por %p60, %p61
      %p63 = scmp.ne.s32.totalorder %s54, %s55
      %p64 = scmp.eq.s32.totalorder %s23, 0
      %p65 = por %p63, %p64
      %p66 = scmp.ne.s32.totalorder %s54, %s55
      %p67 = scmp.eq.s32.totalorder %s24, 1
      %p68 = por %p66, %p67
      %p70 = scmp.ne.s32.totalorder %s55, %s69
      %p71 = scmp.eq.s32.totalorder %s24, 0
      %p72 = por %p70, %p71
      %s74 = sadd.s32 %s73, 1
      %p77 = scmp.eq.s32.totalorder %s18, 1
      %p78 = scmp.ne.s32.totalorder %s73, %s75
      %p79 = scmp.eq.s32.totalorder %s18, 0
      %p80 = por %p78, %p79
      %p81 = scmp.ne.s32.totalorder %s73, %s75
      %p82 = scmp.eq.s32.totalorder %s23, 1
      %p83 = por %p81, %p82
      %p84 = scmp.ne.s32.totalorder %s75, %s76
      %p85 = scmp.eq.s32.totalorder %s23, 0
      %p86 = por %p84, %p85
      %p87 = scmp.ne.s32.totalorder %s75, %s76
      %p88 = scmp.eq.s32.totalorder %s24, 1
      %p89 = por %p87, %p88
      %p91 = scmp.ne.s32.totalorder %s76, %s90
      %p92 = scmp.eq.s32.totalorder %s24, 0
      %p93 = por %p91, %p92
      %s95 = sadd.s32 %s94, 1
      %p98 = scmp.eq.s32.totalorder %s18, 1
      %p99 = scmp.ne.s32.totalorder %s94, %s96
      %p100 = scmp.eq.s32.totalorder %s18, 0
      %p101 = por %p99, %p100
      %p102 = scmp.ne.s32.totalorder %s94, %s96
      %p103 = scmp.eq.s32.totalorder %s23, 1
      %p104 = por %p102, %p103
      %p105 = scmp.ne.s32.totalorder %s96, %s97
      %p106 = scmp.eq.s32.totalorder %s23, 0
      %p107 = por %p105, %p106
      %p108 = scmp.ne.s32.totalorder %s96, %s97
      %p109 = scmp.eq.s32.totalorder %s24, 1
      %p110 = por %p108, %p109
      %p112 = scmp.ne.s32.totalorder %s97, %s111
      %p113 = scmp.eq.s32.totalorder %s24, 0
      %p114 = por %p112, %p113
      %s116 = sadd.s32 %s115, 1
      %p119 = scmp.eq.s32.totalorder %s18, 1
      %p120 = scmp.ne.s32.totalorder %s115, %s117
      %p121 = scmp.eq.s32.totalorder %s18, 0
      %p122 = por %p120, %p121
      %p123 = scmp.ne.s32.totalorder %s115, %s117
      %p124 = scmp.eq.s32.totalorder %s23, 1
      %p125 = por %p123, %p124
      %p126 = scmp.ne.s32.totalorder %s117, %s118
      %p127 = scmp.eq.s32.totalorder %s23, 0
      %p128 = por %p126, %p127
      %p129 = scmp.ne.s32.totalorder %s117, %s118
      %p130 = scmp.eq.s32.totalorder %s24, 1
      %p131 = por %p129, %p130
      %p133 = scmp.ne.s32.totalorder %s118, %s132
      %p134 = scmp.eq.s32.totalorder %s24, 0
      %p135 = por %p133, %p134
      %s137 = sadd.s32 %s136, 1
      %p140 = scmp.eq.s32.totalorder %s18, 1
      %p141 = scmp.ne.s32.totalorder %s136, %s138
      %p142 = scmp.eq.s32.totalorder %s18, 0
      %p143 = por %p141, %p142
      %p144 = scmp.ne.s32.totalorder %s136, %s138
      %p145 = scmp.eq.s32.totalorder %s23, 1
      %p146 = por %p144, %p145
      %p147 = scmp.ne.s32.totalorder %s138, %s139
      %p148 = scmp.eq.s32.totalorder %s23, 0
      %p149 = por %p147, %p148
      %p150 = scmp.ne.s32.totalorder %s138, %s139
      %p151 = scmp.eq.s32.totalorder %s24, 1
      %p152 = por %p150, %p151
      %p154 = scmp.ne.s32.totalorder %s139, %s153
      %p155 = scmp.eq.s32.totalorder %s24, 0
      %p156 = por %p154, %p155
      %s158 = sadd.s32 %s157, 1
      %p161 = scmp.eq.s32.totalorder %s18, 1
      %p162 = scmp.ne.s32.totalorder %s157, %s159
      %p163 = scmp.eq.s32.totalorder %s18, 0
      %p164 = por %p162, %p163
      %p165 = scmp.ne.s32.totalorder %s157, %s159
      %p166 = scmp.eq.s32.totalorder %s23, 1
      %p167 = por %p165, %p166
      %p168 = scmp.ne.s32.totalorder %s159, %s160
      %p169 = scmp.eq.s32.totalorder %s23, 0
      %p170 = por %p168, %p169
      %p171 = scmp.ne.s32.totalorder %s159, %s160
      %p172 = scmp.eq.s32.totalorder %s24, 1
      %p173 = por %p171, %p172
      %p175 = scmp.ne.s32.totalorder %s160, %s174
      %p176 = scmp.eq.s32.totalorder %s24, 0
      %p177 = por %p175, %p176
      %s179 = sadd.s32 %s178, 1
      %p182 = scmp.eq.s32.totalorder %s18, 1
      %p183 = scmp.ne.s32.totalorder %s178, %s180
      %p184 = scmp.eq.s32.totalorder %s18, 0
      %p185 = por %p183, %p184
      %p186 = scmp.ne.s32.totalorder %s178, %s180
      %p187 = scmp.eq.s32.totalorder %s23, 1
      %p188 = por %p186, %p187
      %p189 = scmp.ne.s32.totalorder %s180, %s181
      %p190 = scmp.eq.s32.totalorder %s23, 0
      %p191 = por %p189, %p190
      %p192 = scmp.ne.s32.totalorder %s180, %s181
      %p193 = scmp.eq.s32.totalorder %s24, 1
      %p194 = por %p192, %p193
      %p196 = scmp.ne.s32.totalorder %s181, %s195
      %p197 = scmp.eq.s32.totalorder %s24, 0
      %p198 = por %p196, %p197
      %s200 = sadd.s32 %s199, 1
      %p203 = scmp.eq.s32.totalorder %s18, 1
      %p204 = scmp.ne.s32.totalorder %s199, %s201
      %p205 = scmp.eq.s32.totalorder %s18, 0
      %p206 = por %p204, %p205
      %p207 = scmp.ne.s32.totalorder %s199, %s201
      %p208 = scmp.eq.s32.totalorder %s23, 1
      %p209 = por %p207, %p208
      %p210 = scmp.ne.s32.totalorder %s201, %s202
      %p211 = scmp.eq.s32.totalorder %s23, 0
      %p212 = por %p210, %p211
      %p213 = scmp.ne.s32.totalorder %s201, %s202
      %p214 = scmp.eq.s32.totalorder %s24, 1
      %p215 = por %p213, %p214
      %p217 = scmp.ne.s32.totalorder %s202, %s216
      %p218 = scmp.eq.s32.totalorder %s24, 0
      %p219 = por %p217, %p218
      %s220 = ssub.s32 %s18, %s25
      %p221 = scmp.eq.s32.totalorder %s220, 0
      %s223 = sadd.s32 %s222, 1
      %s224 = scalar_select %p221, %s222, %s223
      %p227 = pneg %p221
      %p228 = scmp.eq.s32.totalorder %s18, 1
      %p229 = por %p227, %p228
      %p230 = scmp.ne.s32.totalorder %s222, %s225
      %p231 = scmp.eq.s32.totalorder %s18, 0
      %p232 = por %p230, %p231
      %p233 = scmp.ne.s32.totalorder %s222, %s225
      %p234 = scmp.eq.s32.totalorder %s23, 1
      %p235 = por %p233, %p234
      %p236 = scmp.ne.s32.totalorder %s225, %s226
      %p237 = scmp.eq.s32.totalorder %s23, 0
      %p238 = por %p236, %p237
      %p239 = scmp.ne.s32.totalorder %s225, %s226
      %p240 = scmp.eq.s32.totalorder %s24, 1
      %p241 = por %p239, %p240
      %p243 = scmp.ne.s32.totalorder %s226, %s242
      %p244 = scmp.eq.s32.totalorder %s24, 0
      %p245 = por %p243, %p244
      %p246 = scmp.le.s32.totalorder 1, %s18
      %p247 = scmp.lt.s32.totalorder %s18, 3
      %p248 = pnand %p246, %p247
      %p249 = pneg %p248
      // Predicated region
      $region9: #{tpu_custom_call.1} parent=5 // pred_check
        _
      $region10: #{tpu_custom_call.1} parent=5 // pred_check_branch
        %251 = sbr.rel (%p248) target = $region12
      $region11: #{tpu_custom_call.1} parent=5 // pred_region
        %s252 = ssub.s32 %s18, 1
        // Predicated region
        $region13: #{tpu_custom_call.1} parent=11 // pred_check
          %p253 = pneg %p65
        $region14: #{tpu_custom_call.1} parent=11 // pred_check_branch
          %255 = sbr.rel (%p253) target = $region16
        $region15: #{tpu_custom_call.1} parent=11 // pred_region
          _
        $region16: #{tpu_custom_call.1} parent=11 // pred_fallthru
          _
        // Predicated region
        $region17: #{tpu_custom_call.1} parent=11 // pred_check
          %p256 = pneg %p86
        $region18: #{tpu_custom_call.1} parent=11 // pred_check_branch
          %258 = sbr.rel (%p256) target = $region20
        $region19: #{tpu_custom_call.1} parent=11 // pred_region
          _
        $region20: #{tpu_custom_call.1} parent=11 // pred_fallthru
          _
        // Predicated region
        $region21: #{tpu_custom_call.1} parent=11 // pred_check
          %p259 = pneg %p107
        $region22: #{tpu_custom_call.1} parent=11 // pred_check_branch
          %261 = sbr.rel (%p259) target = $region24
        $region23: #{tpu_custom_call.1} parent=11 // pred_region
          %s263 = ssub.s32 16384, 16384
          %264 = vsyncadd [#allocation4], %s263
          %s265 = sshll.u32 [#allocation3], 4
          %s266 = int_to_ptr.vmem [resolvable:$true] %s265
          %271 = dma.hbm_to_vmem [thread:$0]  %s3, 16384, %s266, [#allocation4], 512, 512, 32
        $region24: #{tpu_custom_call.1} parent=11 // pred_fallthru
          _
        // Predicated region
        $region25: #{tpu_custom_call.1} parent=11 // pred_check
          %p272 = pneg %p128
        $region26: #{tpu_custom_call.1} parent=11 // pred_check_branch
          %274 = sbr.rel (%p272) target = $region28
        $region27: #{tpu_custom_call.1} parent=11 // pred_region
          _
        $region28: #{tpu_custom_call.1} parent=11 // pred_fallthru
          _
        // Predicated region
        $region29: #{tpu_custom_call.1} parent=11 // pred_check
          %p275 = pneg %p149
        $region30: #{tpu_custom_call.1} parent=11 // pred_check_branch
          %277 = sbr.rel (%p275) target = $region32
        $region31: #{tpu_custom_call.1} parent=11 // pred_region
          _
        $region32: #{tpu_custom_call.1} parent=11 // pred_fallthru
          _
        // Predicated region
        $region33: #{tpu_custom_call.1} parent=11 // pred_check
          %p278 = pneg %p170
        $region34: #{tpu_custom_call.1} parent=11 // pred_check_branch
          %280 = sbr.rel (%p278) target = $region36
        $region35: #{tpu_custom_call.1} parent=11 // pred_region
          _
        $region36: #{tpu_custom_call.1} parent=11 // pred_fallthru
          _
        // Predicated region
        $region37: #{tpu_custom_call.1} parent=11 // pred_check
          %p281 = pneg %p191
        $region38: #{tpu_custom_call.1} parent=11 // pred_check_branch
          %283 = sbr.rel (%p281) target = $region40
        $region39: #{tpu_custom_call.1} parent=11 // pred_region
          _
        $region40: #{tpu_custom_call.1} parent=11 // pred_fallthru
          _
        // Predicated region
        $region41: #{tpu_custom_call.1} parent=11 // pred_check
          %p284 = pneg %p212
        $region42: #{tpu_custom_call.1} parent=11 // pred_check_branch
          %286 = sbr.rel (%p284) target = $region44
        $region43: #{tpu_custom_call.1} parent=11 // pred_region
          _
        $region44: #{tpu_custom_call.1} parent=11 // pred_fallthru
          _
      $region12: #{tpu_custom_call.1} parent=5 // pred_fallthru
        _
      %p287 = scmp.lt.s32.totalorder %s18, 2
      // Predicated region
      $region45: #{tpu_custom_call.1} parent=5 // pred_check
        %p288 = pneg %p287
      $region46: #{tpu_custom_call.1} parent=5 // pred_check_branch
        %290 = sbr.rel (%p288) target = $region48
      $region47: #{tpu_custom_call.1} parent=5 // pred_region
        // Predicated region
        $region49: #{tpu_custom_call.1} parent=47 // pred_check
          %p291 = pneg %p38
        $region50: #{tpu_custom_call.1} parent=47 // pred_check_branch
          %293 = sbr.rel (%p291) target = $region52
        $region51: #{tpu_custom_call.1} parent=47 // pred_region
          %s294 = smul.u32 2, %s18
          %p295 = scmp.lt.s32.totalorder %s294, 3
          %s296 = scalar_select %p295, %s294, 3
          %s297 = smul.addr %s296, 8
          %s298 = scalar_lea.vmem %s0, %s297
          %s299 = smul.u32 2, %s18
        $region52: #{tpu_custom_call.1} parent=47 // pred_fallthru
          _
      $region48: #{tpu_custom_call.1} parent=5 // pred_fallthru
        _
      %p300 = scmp.le.s32.totalorder 1, %s18
      %p301 = scmp.lt.s32.totalorder %s18, 3
      %p302 = pnand %p300, %p301
      %p303 = pneg %p302
      // Predicated region
      $region53: #{tpu_custom_call.1} parent=5 // pred_check
        _
      $region54: #{tpu_custom_call.1} parent=5 // pred_check_branch
        %305 = sbr.rel (%p302) target = $region56
      $region55: #{tpu_custom_call.1} parent=5 // pred_region
        %s306 = ssub.s32 %s18, 1
        // Predicated region
        $region57: #{tpu_custom_call.1} parent=55 // pred_check
          %p307 = pneg %p107
        $region58: #{tpu_custom_call.1} parent=55 // pred_check_branch
          %309 = sbr.rel (%p307) target = $region60
        $region59: #{tpu_custom_call.1} parent=55 // pred_region
          %310 = dma.done [#allocation4], 16384
        $region60: #{tpu_custom_call.1} parent=55 // pred_fallthru
          _
        %s311 = smul.u32 2, %s23
        %p312 = scmp.lt.s32.totalorder %s311, 3
        %s313 = scalar_select %p312, %s311, 3
        %s314 = smul.addr %s313, 8
        %s315 = scalar_lea.vmem %s0, %s314
        %p316 = pneg %p44
        %p317 = pneg %p41
        %p318 = pneg %p65
        %p319 = pneg %p62
        %p320 = pneg %p86
        %p321 = pneg %p83
        %p322 = pneg %p107
        %p323 = pneg %p104
        %p324 = pneg %p128
        %p325 = pneg %p125
        %p326 = pneg %p149
        %p327 = pneg %p146
        %p328 = pneg %p170
        %p329 = pneg %p167
        %p330 = pneg %p191
        %p331 = pneg %p188
        %p332 = pneg %p212
        %p333 = pneg %p209
        %p334 = pneg %p238
        %p335 = pneg %p235
        %s336 = smul.u32 2, %s23
        %p337 = scmp.lt.s32.totalorder %s336, 3
        %s338 = scalar_select %p337, %s336, 3
        %s339 = smul.addr %s338, 8
        %s340 = scalar_lea.vmem %s9, %s339
        %s341 = smul.u32 2, %s23
        %p342 = scmp.lt.s32.totalorder %s341, 3
        %s343 = scalar_select %p342, %s341, 3
        %s344 = smul.addr %s343, 8
        %s345 = scalar_lea.vmem %s0, %s344
        %s346 = smul.u32 2, %s23
        %s347 = smul.u32 2, %s23
        %p348 = scmp.lt.s32.totalorder %s347, 3
        %s349 = scalar_select %p348, %s347, 3
        %s350 = smul.addr %s349, 8
        %s351 = scalar_lea.vmem %s9, %s350
        %s352 = smul.u32 2, %s23
        %v353 = vld [vmem:[%s345] sm:$0xff]
        %v354 = vld [vmem:[%s345 + $0x8] sm:$0xff]
        %v355 = vld [vmem:[%s1] sm:$0xff]
        %v356 = vld [vmem:[%s1 + $0x8] sm:$0xff]
        %v357 = vld [vmem:[%s1 + $0x10] sm:$0xff]
        %v358 = vld [vmem:[%s1 + $0x18] sm:$0xff]
        %v359 = vld [vmem:[%s2] sm:$0x3]
        %v361 = vlaneseq
        %v362 = vshrl.u32 %v361, 7
        %v363 = vsub.s32 0, %v362
        %v364 = vrot.slane %v359, %v363
        %v365 = vlaneseq
        %v366 = vshrl.u32 %v365, 7
        %v367 = vsub.s32 1, %v366
        %v368 = vrot.slane %v359, %v367
        %vm371 = vcmask 130048
        %v373 = vsel %vm371, %v353, 0
        %v376 = vsel %vm371, %v354, 0
        %378 = vmatprep.subr.mxu0 0.0
        %379 = vmatpush1.msra.mxu0 0.0
        %380 = vmatprep.subr.mxu0 0.0
        %381 = vmatpush1.msra.mxu0 0.0
        %382 = vmatprep.subr.mxu0 0.0
        %383 = vmatpush1.msra.mxu0 0.0
        %384 = vmatprep.subr.mxu0 0.0
        %385 = vmatpush1.msra.mxu0 0.0
        %386 = vmatprep.subr.mxu0 0.0
        %387 = vmatpush1.msra.mxu0 0.0
        %388 = vmatprep.subr.mxu0 0.0
        %389 = vmatpush1.msra.mxu0 0.0
        %390 = vmatprep.subr.mxu0 0.0
        %391 = vmatpush1.msra.mxu0 0.0
        %392 = vmatprep.subr.mxu0 0.0
        %393 = vmatpush1.msra.mxu0 0.0
        %394 = vmatprep.subr.mxu0 0.0
        %395 = vmatpush1.msra.mxu0 0.0
        %396 = vmatprep.subr.mxu0 0.0
        %397 = vmatpush1.msra.mxu0 0.0
        %398 = vmatprep.subr.mxu0 0.0
        %399 = vmatpush1.msra.mxu0 0.0
        %400 = vmatprep.subr.mxu0 0.0
        %401 = vmatpush1.msra.mxu0 0.0
        %402 = vmatprep.subr.mxu0 0.0
        %403 = vmatpush1.msra.mxu0 0.0
        %404 = vmatprep.subr.mxu0 0.0
        %405 = vmatpush1.msra.mxu0 0.0
        %406 = vmatprep.subr.mxu0 %v358
        %407 = vmatpush1.msra.mxu0 %v357
        %408 = vmatprep.subr.mxu0 %v356
        %409 = vmatpush1.msra.mxu0 %v355
        %410 = vmatprep.subr.mxu0 0.0
        %411 = vmatpush2.msra.mxu0 0.0
        %412 = vmatprep.subr.mxu0 0.0
        %413 = vmatpush2.msra.mxu0 0.0
        %414 = vmatprep.subr.mxu0 0.0
        %415 = vmatpush2.msra.mxu0 0.0
        %416 = vmatprep.subr.mxu0 0.0
        %417 = vmatpush2.msra.mxu0 0.0
        %418 = vmatprep.subr.mxu0 0.0
        %419 = vmatpush2.msra.mxu0 0.0
        %420 = vmatprep.subr.mxu0 0.0
        %421 = vmatpush2.msra.mxu0 0.0
        %422 = vmatprep.subr.mxu0 0.0
        %423 = vmatpush2.msra.mxu0 0.0
        %424 = vmatprep.subr.mxu0 0.0
        %425 = vmatpush2.msra.mxu0 0.0
        %426 = vmatprep.subr.mxu0 0.0
        %427 = vmatpush2.msra.mxu0 0.0
        %428 = vmatprep.subr.mxu0 0.0
        %429 = vmatpush2.msra.mxu0 0.0
        %430 = vmatprep.subr.mxu0 0.0
        %431 = vmatpush2.msra.mxu0 0.0
        %432 = vmatprep.subr.mxu0 0.0
        %433 = vmatpush2.msra.mxu0 0.0
        %434 = vmatprep.subr.mxu0 0.0
        %435 = vmatpush2.msra.mxu0 0.0
        %436 = vmatprep.subr.mxu0 0.0
        %437 = vmatpush2.msra.mxu0 0.0
        %438 = vmatprep.subr.mxu0 0.0
        %439 = vmatpush2.msra.mxu0 0.0
        %440 = vmatprep.subr.mxu0 0.0
        %441 = vmatpush2.msra.mxu0 0.0
        %442 = vmatprep.mubr.f32.mxu0 0.0
        %443 = vmatmul.mubr.f32.gmra.mxu0 %v373
        %v444 = vpop.f32.mrf.mxu0
        %v445 = vadd.f32 %v364, %v444
        %v446 = vpop.f32.mrf.mxu0
        %v447 = vadd.f32 %v368, %v446
        %448 = vmatprep.mubr.f32.mxu0 0.0
        %449 = vmatmul.mubr.f32.gmra.mxu0 %v376
        %v450 = vpop.f32.mrf.mxu0
        %v451 = vadd.f32 %v364, %v450
        %v452 = vpop.f32.mrf.mxu0
        %v453 = vadd.f32 %v368, %v452
        %454 = vdwg.mxu0
        %v455 = vmax.f32 %v445, 0.0
        %v456 = vmax.f32 %v447, 0.0
        %v457 = vmax.f32 %v451, 0.0
        %v458 = vmax.f32 %v453, 0.0
        %v459 = vld [vmem:[#allocation3] sm:$0xff]
        %v460 = vld [vmem:[#allocation3 + $0x8] sm:$0xff]
        %v461 = vld [vmem:[#allocation3 + $0x10] sm:$0xff]
        %v462 = vld [vmem:[#allocation3 + $0x18] sm:$0xff]
        %v463 = vld [vmem:[#allocation3 + $0x20] sm:$0xff]
        %v464 = vld [vmem:[#allocation3 + $0x28] sm:$0xff]
        %v465 = vld [vmem:[#allocation3 + $0x30] sm:$0xff]
        %v466 = vld [vmem:[#allocation3 + $0x38] sm:$0xff]
        %v467 = vld [vmem:[#allocation3 + $0x40] sm:$0xff]
        %v468 = vld [vmem:[#allocation3 + $0x48] sm:$0xff]
        %v469 = vld [vmem:[#allocation3 + $0x50] sm:$0xff]
        %v470 = vld [vmem:[#allocation3 + $0x58] sm:$0xff]
        %v471 = vld [vmem:[#allocation3 + $0x60] sm:$0xff]
        %v472 = vld [vmem:[#allocation3 + $0x68] sm:$0xff]
        %v473 = vld [vmem:[#allocation3 + $0x70] sm:$0xff]
        %v474 = vld [vmem:[#allocation3 + $0x78] sm:$0xff]
        %v475 = vld [vmem:[#allocation3 + $0x80] sm:$0xff]
        %v476 = vld [vmem:[#allocation3 + $0x88] sm:$0xff]
        %v477 = vld [vmem:[#allocation3 + $0x90] sm:$0xff]
        %v478 = vld [vmem:[#allocation3 + $0x98] sm:$0xff]
        %v479 = vld [vmem:[#allocation3 + $0xa0] sm:$0xff]
        %v480 = vld [vmem:[#allocation3 + $0xa8] sm:$0xff]
        %v481 = vld [vmem:[#allocation3 + $0xb0] sm:$0xff]
        %v482 = vld [vmem:[#allocation3 + $0xb8] sm:$0xff]
        %v483 = vld [vmem:[#allocation3 + $0xc0] sm:$0xff]
        %v484 = vld [vmem:[#allocation3 + $0xc8] sm:$0xff]
        %v485 = vld [vmem:[#allocation3 + $0xd0] sm:$0xff]
        %v486 = vld [vmem:[#allocation3 + $0xd8] sm:$0xff]
        %v487 = vld [vmem:[#allocation3 + $0xe0] sm:$0xff]
        %v488 = vld [vmem:[#allocation3 + $0xe8] sm:$0xff]
        %v489 = vld [vmem:[#allocation3 + $0xf0] sm:$0xff]
        %v490 = vld [vmem:[#allocation3 + $0xf8] sm:$0xff]
        %v491 = vld [vmem:[#allocation3 + $0x100] sm:$0xff]
        %v492 = vld [vmem:[#allocation3 + $0x108] sm:$0xff]
        %v493 = vld [vmem:[#allocation3 + $0x110] sm:$0xff]
        %v494 = vld [vmem:[#allocation3 + $0x118] sm:$0xff]
        %v495 = vld [vmem:[#allocation3 + $0x120] sm:$0xff]
        %v496 = vld [vmem:[#allocation3 + $0x128] sm:$0xff]
        %v497 = vld [vmem:[#allocation3 + $0x130] sm:$0xff]
        %v498 = vld [vmem:[#allocation3 + $0x138] sm:$0xff]
        %v499 = vld [vmem:[#allocation3 + $0x140] sm:$0xff]
        %v500 = vld [vmem:[#allocation3 + $0x148] sm:$0xff]
        %v501 = vld [vmem:[#allocation3 + $0x150] sm:$0xff]
        %v502 = vld [vmem:[#allocation3 + $0x158] sm:$0xff]
        %v503 = vld [vmem:[#allocation3 + $0x160] sm:$0xff]
        %v504 = vld [vmem:[#allocation3 + $0x168] sm:$0xff]
        %v505 = vld [vmem:[#allocation3 + $0x170] sm:$0xff]
        %v506 = vld [vmem:[#allocation3 + $0x178] sm:$0xff]
        %v507 = vld [vmem:[#allocation3 + $0x180] sm:$0xff]
        %v508 = vld [vmem:[#allocation3 + $0x188] sm:$0xff]
        %v509 = vld [vmem:[#allocation3 + $0x190] sm:$0xff]
        %v510 = vld [vmem:[#allocation3 + $0x198] sm:$0xff]
        %v511 = vld [vmem:[#allocation3 + $0x1a0] sm:$0xff]
        %v512 = vld [vmem:[#allocation3 + $0x1a8] sm:$0xff]
        %v513 = vld [vmem:[#allocation3 + $0x1b0] sm:$0xff]
        %v514 = vld [vmem:[#allocation3 + $0x1b8] sm:$0xff]
        %v515 = vld [vmem:[#allocation3 + $0x1c0] sm:$0xff]
        %v516 = vld [vmem:[#allocation3 + $0x1c8] sm:$0xff]
        %v517 = vld [vmem:[#allocation3 + $0x1d0] sm:$0xff]
        %v518 = vld [vmem:[#allocation3 + $0x1d8] sm:$0xff]
        %v519 = vld [vmem:[#allocation3 + $0x1e0] sm:$0xff]
        %v520 = vld [vmem:[#allocation3 + $0x1e8] sm:$0xff]
        %v521 = vld [vmem:[#allocation3 + $0x1f0] sm:$0xff]
        %v522 = vld [vmem:[#allocation3 + $0x1f8] sm:$0xff]
        %v523 = vld [vmem:[#allocation3 + $0x200] sm:$0xff]
        %v524 = vld [vmem:[#allocation3 + $0x208] sm:$0xff]
        %v525 = vld [vmem:[#allocation3 + $0x210] sm:$0xff]
        %v526 = vld [vmem:[#allocation3 + $0x218] sm:$0xff]
        %v527 = vld [vmem:[#allocation3 + $0x220] sm:$0xff]
        %v528 = vld [vmem:[#allocation3 + $0x228] sm:$0xff]
        %v529 = vld [vmem:[#allocation3 + $0x230] sm:$0xff]
        %v530 = vld [vmem:[#allocation3 + $0x238] sm:$0xff]
        %v531 = vld [vmem:[#allocation3 + $0x240] sm:$0xff]
        %v532 = vld [vmem:[#allocation3 + $0x248] sm:$0xff]
        %v533 = vld [vmem:[#allocation3 + $0x250] sm:$0xff]
        %v534 = vld [vmem:[#allocation3 + $0x258] sm:$0xff]
        %v535 = vld [vmem:[#allocation3 + $0x260] sm:$0xff]
        %v536 = vld [vmem:[#allocation3 + $0x268] sm:$0xff]
        %v537 = vld [vmem:[#allocation3 + $0x270] sm:$0xff]
        %v538 = vld [vmem:[#allocation3 + $0x278] sm:$0xff]
        %v539 = vld [vmem:[#allocation3 + $0x280] sm:$0xff]
        %v540 = vld [vmem:[#allocation3 + $0x288] sm:$0xff]
        %v541 = vld [vmem:[#allocation3 + $0x290] sm:$0xff]
        %v542 = vld [vmem:[#allocation3 + $0x298] sm:$0xff]
        %v543 = vld [vmem:[#allocation3 + $0x2a0] sm:$0xff]
        %v544 = vld [vmem:[#allocation3 + $0x2a8] sm:$0xff]
        %v545 = vld [vmem:[#allocation3 + $0x2b0] sm:$0xff]
        %v546 = vld [vmem:[#allocation3 + $0x2b8] sm:$0xff]
        %v547 = vld [vmem:[#allocation3 + $0x2c0] sm:$0xff]
        %v548 = vld [vmem:[#allocation3 + $0x2c8] sm:$0xff]
        %v549 = vld [vmem:[#allocation3 + $0x2d0] sm:$0xff]
        %v550 = vld [vmem:[#allocation3 + $0x2d8] sm:$0xff]
        %v551 = vld [vmem:[#allocation3 + $0x2e0] sm:$0xff]
        %v552 = vld [vmem:[#allocation3 + $0x2e8] sm:$0xff]
        %v553 = vld [vmem:[#allocation3 + $0x2f0] sm:$0xff]
        %v554 = vld [vmem:[#allocation3 + $0x2f8] sm:$0xff]
        %v555 = vld [vmem:[#allocation3 + $0x300] sm:$0xff]
        %v556 = vld [vmem:[#allocation3 + $0x308] sm:$0xff]
        %v557 = vld [vmem:[#allocation3 + $0x310] sm:$0xff]
        %v558 = vld [vmem:[#allocation3 + $0x318] sm:$0xff]
        %v559 = vld [vmem:[#allocation3 + $0x320] sm:$0xff]
        %v560 = vld [vmem:[#allocation3 + $0x328] sm:$0xff]
        %v561 = vld [vmem:[#allocation3 + $0x330] sm:$0xff]
        %v562 = vld [vmem:[#allocation3 + $0x338] sm:$0xff]
        %v563 = vld [vmem:[#allocation3 + $0x340] sm:$0xff]
        %v564 = vld [vmem:[#allocation3 + $0x348] sm:$0xff]
        %v565 = vld [vmem:[#allocation3 + $0x350] sm:$0xff]
        %v566 = vld [vmem:[#allocation3 + $0x358] sm:$0xff]
        %v567 = vld [vmem:[#allocation3 + $0x360] sm:$0xff]
        %v568 = vld [vmem:[#allocation3 + $0x368] sm:$0xff]
        %v569 = vld [vmem:[#allocation3 + $0x370] sm:$0xff]
        %v570 = vld [vmem:[#allocation3 + $0x378] sm:$0xff]
        %v571 = vld [vmem:[#allocation3 + $0x380] sm:$0xff]
        %v572 = vld [vmem:[#allocation3 + $0x388] sm:$0xff]
        %v573 = vld [vmem:[#allocation3 + $0x390] sm:$0xff]
        %v574 = vld [vmem:[#allocation3 + $0x398] sm:$0xff]
        %v575 = vld [vmem:[#allocation3 + $0x3a0] sm:$0xff]
        %v576 = vld [vmem:[#allocation3 + $0x3a8] sm:$0xff]
        %v577 = vld [vmem:[#allocation3 + $0x3b0] sm:$0xff]
        %v578 = vld [vmem:[#allocation3 + $0x3b8] sm:$0xff]
        %v579 = vld [vmem:[#allocation3 + $0x3c0] sm:$0xff]
        %v580 = vld [vmem:[#allocation3 + $0x3c8] sm:$0xff]
        %v581 = vld [vmem:[#allocation3 + $0x3d0] sm:$0xff]
        %v582 = vld [vmem:[#allocation3 + $0x3d8] sm:$0xff]
        %v583 = vld [vmem:[#allocation3 + $0x3e0] sm:$0xff]
        %v584 = vld [vmem:[#allocation3 + $0x3e8] sm:$0xff]
        %v585 = vld [vmem:[#allocation3 + $0x3f0] sm:$0xff]
        %v586 = vld [vmem:[#allocation3 + $0x3f8] sm:$0xff]
        %v587 = vld [vmem:[%s4] sm:$0xf]
        %v589 = vlaneseq
        %v590 = vshrl.u32 %v589, 7
        %v591 = vsub.s32 0, %v590
        %v592 = vrot.slane %v587, %v591
        %v593 = vlaneseq
        %v594 = vshrl.u32 %v593, 7
        %v595 = vsub.s32 1, %v594
        %v596 = vrot.slane %v587, %v595
        %v597 = vlaneseq
        %v598 = vshrl.u32 %v597, 7
        %v599 = vsub.s32 2, %v598
        %v600 = vrot.slane %v587, %v599
        %v601 = vlaneseq
        %v602 = vshrl.u32 %v601, 7
        %v603 = vsub.s32 3, %v602
        %v604 = vrot.slane %v587, %v603
        %609 = vmatprep.subr.mxu0 %v520
        %610 = vmatpush1.msra.mxu0 %v519
        %611 = vmatprep.subr.mxu0 %v516
        %612 = vmatpush1.msra.mxu0 %v515
        %613 = vmatprep.subr.mxu0 %v512
        %614 = vmatpush1.msra.mxu0 %v511
        %615 = vmatprep.subr.mxu0 %v508
        %616 = vmatpush1.msra.mxu0 %v507
        %617 = vmatprep.subr.mxu0 %v504
        %618 = vmatpush1.msra.mxu0 %v503
        %619 = vmatprep.subr.mxu0 %v500
        %620 = vmatpush1.msra.mxu0 %v499
        %621 = vmatprep.subr.mxu0 %v496
        %622 = vmatpush1.msra.mxu0 %v495
        %623 = vmatprep.subr.mxu0 %v492
        %624 = vmatpush1.msra.mxu0 %v491
        %625 = vmatprep.subr.mxu0 %v488
        %626 = vmatpush1.msra.mxu0 %v487
        %627 = vmatprep.subr.mxu0 %v484
        %628 = vmatpush1.msra.mxu0 %v483
        %629 = vmatprep.subr.mxu0 %v480
        %630 = vmatpush1.msra.mxu0 %v479
        %631 = vmatprep.subr.mxu0 %v476
        %632 = vmatpush1.msra.mxu0 %v475
        %633 = vmatprep.subr.mxu0 %v472
        %634 = vmatpush1.msra.mxu0 %v471
        %635 = vmatprep.subr.mxu0 %v468
        %636 = vmatpush1.msra.mxu0 %v467
        %637 = vmatprep.subr.mxu0 %v464
        %638 = vmatpush1.msra.mxu0 %v463
        %639 = vmatprep.subr.mxu0 %v460
        %640 = vmatpush1.msra.mxu0 %v459
        %641 = vmatprep.subr.mxu0 %v584
        %642 = vmatpush2.msra.mxu0 %v583
        %643 = vmatprep.subr.mxu0 %v580
        %644 = vmatpush2.msra.mxu0 %v579
        %645 = vmatprep.subr.mxu0 %v576
        %646 = vmatpush2.msra.mxu0 %v575
        %647 = vmatprep.subr.mxu0 %v572
        %648 = vmatpush2.msra.mxu0 %v571
        %649 = vmatprep.subr.mxu0 %v568
        %650 = vmatpush2.msra.mxu0 %v567
        %651 = vmatprep.subr.mxu0 %v564
        %652 = vmatpush2.msra.mxu0 %v563
        %653 = vmatprep.subr.mxu0 %v560
        %654 = vmatpush2.msra.mxu0 %v559
        %655 = vmatprep.subr.mxu0 %v556
        %656 = vmatpush2.msra.mxu0 %v555
        %657 = vmatprep.subr.mxu0 %v552
        %658 = vmatpush2.msra.mxu0 %v551
        %659 = vmatprep.subr.mxu0 %v548
        %660 = vmatpush2.msra.mxu0 %v547
        %661 = vmatprep.subr.mxu0 %v544
        %662 = vmatpush2.msra.mxu0 %v543
        %663 = vmatprep.subr.mxu0 %v540
        %664 = vmatpush2.msra.mxu0 %v539
        %665 = vmatprep.subr.mxu0 %v536
        %666 = vmatpush2.msra.mxu0 %v535
        %667 = vmatprep.subr.mxu0 %v532
        %668 = vmatpush2.msra.mxu0 %v531
        %669 = vmatprep.subr.mxu0 %v528
        %670 = vmatpush2.msra.mxu0 %v527
        %671 = vmatprep.subr.mxu0 %v524
        %672 = vmatpush2.msra.mxu0 %v523
        %673 = vmatprep.mubr.f32.mxu0 %v456
        %674 = vmatmul.mubr.f32.gmra.mxu0 %v455
        %v675 = vpop.f32.mrf.mxu0
        %v676 = vadd.f32 %v592, %v675
        %v677 = vpop.f32.mrf.mxu0
        %v678 = vadd.f32 %v596, %v677
        %679 = vmatprep.mubr.f32.mxu0 %v458
        %680 = vmatmul.mubr.f32.gmra.mxu0 %v457
        %v681 = vpop.f32.mrf.mxu0
        %v682 = vadd.f32 %v592, %v681
        %v683 = vpop.f32.mrf.mxu0
        %v684 = vadd.f32 %v596, %v683
        %685 = vdwg.mxu0
        %686 = vmatprep.subr.mxu0 %v522
        %687 = vmatpush1.msra.mxu0 %v521
        %688 = vmatprep.subr.mxu0 %v518
        %689 = vmatpush1.msra.mxu0 %v517
        %690 = vmatprep.subr.mxu0 %v514
        %691 = vmatpush1.msra.mxu0 %v513
        %692 = vmatprep.subr.mxu0 %v510
        %693 = vmatpush1.msra.mxu0 %v509
        %694 = vmatprep.subr.mxu0 %v506
        %695 = vmatpush1.msra.mxu0 %v505
        %696 = vmatprep.subr.mxu0 %v502
        %697 = vmatpush1.msra.mxu0 %v501
        %698 = vmatprep.subr.mxu0 %v498
        %699 = vmatpush1.msra.mxu0 %v497
        %700 = vmatprep.subr.mxu0 %v494
        %701 = vmatpush1.msra.mxu0 %v493
        %702 = vmatprep.subr.mxu0 %v490
        %703 = vmatpush1.msra.mxu0 %v489
        %704 = vmatprep.subr.mxu0 %v486
        %705 = vmatpush1.msra.mxu0 %v485
        %706 = vmatprep.subr.mxu0 %v482
        %707 = vmatpush1.msra.mxu0 %v481
        %708 = vmatprep.subr.mxu0 %v478
        %709 = vmatpush1.msra.mxu0 %v477
        %710 = vmatprep.subr.mxu0 %v474
        %711 = vmatpush1.msra.mxu0 %v473
        %712 = vmatprep.subr.mxu0 %v470
        %713 = vmatpush1.msra.mxu0 %v469
        %714 = vmatprep.subr.mxu0 %v466
        %715 = vmatpush1.msra.mxu0 %v465
        %716 = vmatprep.subr.mxu0 %v462
        %717 = vmatpush1.msra.mxu0 %v461
        %718 = vmatprep.subr.mxu0 %v586
        %719 = vmatpush2.msra.mxu0 %v585
        %720 = vmatprep.subr.mxu0 %v582
        %721 = vmatpush2.msra.mxu0 %v581
        %722 = vmatprep.subr.mxu0 %v578
        %723 = vmatpush2.msra.mxu0 %v577
        %724 = vmatprep.subr.mxu0 %v574
        %725 = vmatpush2.msra.mxu0 %v573
        %726 = vmatprep.subr.mxu0 %v570
        %727 = vmatpush2.msra.mxu0 %v569
        %728 = vmatprep.subr.mxu0 %v566
        %729 = vmatpush2.msra.mxu0 %v565
        %730 = vmatprep.subr.mxu0 %v562
        %731 = vmatpush2.msra.mxu0 %v561
        %732 = vmatprep.subr.mxu0 %v558
        %733 = vmatpush2.msra.mxu0 %v557
        %734 = vmatprep.subr.mxu0 %v554
        %735 = vmatpush2.msra.mxu0 %v553
        %736 = vmatprep.subr.mxu0 %v550
        %737 = vmatpush2.msra.mxu0 %v549
        %738 = vmatprep.subr.mxu0 %v546
        %739 = vmatpush2.msra.mxu0 %v545
        %740 = vmatprep.subr.mxu0 %v542
        %741 = vmatpush2.msra.mxu0 %v541
        %742 = vmatprep.subr.mxu0 %v538
        %743 = vmatpush2.msra.mxu0 %v537
        %744 = vmatprep.subr.mxu0 %v534
        %745 = vmatpush2.msra.mxu0 %v533
        %746 = vmatprep.subr.mxu0 %v530
        %747 = vmatpush2.msra.mxu0 %v529
        %748 = vmatprep.subr.mxu0 %v526
        %749 = vmatpush2.msra.mxu0 %v525
        %750 = vmatprep.mubr.f32.mxu0 %v456
        %751 = vmatmul.mubr.f32.gmra.mxu0 %v455
        %v752 = vpop.f32.mrf.mxu0
        %v753 = vadd.f32 %v600, %v752
        %v754 = vpop.f32.mrf.mxu0
        %v755 = vadd.f32 %v604, %v754
        %756 = vmatprep.mubr.f32.mxu0 %v458
        %757 = vmatmul.mubr.f32.gmra.mxu0 %v457
        %v758 = vpop.f32.mrf.mxu0
        %v759 = vadd.f32 %v600, %v758
        %v760 = vpop.f32.mrf.mxu0
        %v761 = vadd.f32 %v604, %v760
        %762 = vdwg.mxu0
        %v763 = vmax.f32 %v676, 0.0
        %v764 = vmax.f32 %v678, 0.0
        %v765 = vmax.f32 %v753, 0.0
        %v766 = vmax.f32 %v755, 0.0
        %v767 = vmax.f32 %v682, 0.0
        %v768 = vmax.f32 %v684, 0.0
        %v769 = vmax.f32 %v759, 0.0
        %v770 = vmax.f32 %v761, 0.0
        %v771 = vld [vmem:[%s5] sm:$0xff]
        %v772 = vld [vmem:[%s5 + $0x8] sm:$0xff]
        %v773 = vld [vmem:[%s5 + $0x10] sm:$0xff]
        %v774 = vld [vmem:[%s5 + $0x18] sm:$0xff]
        %v775 = vld [vmem:[%s5 + $0x20] sm:$0xff]
        %v776 = vld [vmem:[%s5 + $0x28] sm:$0xff]
        %v777 = vld [vmem:[%s5 + $0x30] sm:$0xff]
        %v778 = vld [vmem:[%s5 + $0x38] sm:$0xff]
        %v779 = vld [vmem:[%s5 + $0x40] sm:$0xff]
        %v780 = vld [vmem:[%s5 + $0x48] sm:$0xff]
        %v781 = vld [vmem:[%s5 + $0x50] sm:$0xff]
        %v782 = vld [vmem:[%s5 + $0x58] sm:$0xff]
        %v783 = vld [vmem:[%s5 + $0x60] sm:$0xff]
        %v784 = vld [vmem:[%s5 + $0x68] sm:$0xff]
        %v785 = vld [vmem:[%s5 + $0x70] sm:$0xff]
        %v786 = vld [vmem:[%s5 + $0x78] sm:$0xff]
        %v787 = vld [vmem:[%s5 + $0x80] sm:$0xff]
        %v788 = vld [vmem:[%s5 + $0x88] sm:$0xff]
        %v789 = vld [vmem:[%s5 + $0x90] sm:$0xff]
        %v790 = vld [vmem:[%s5 + $0x98] sm:$0xff]
        %v791 = vld [vmem:[%s5 + $0xa0] sm:$0xff]
        %v792 = vld [vmem:[%s5 + $0xa8] sm:$0xff]
        %v793 = vld [vmem:[%s5 + $0xb0] sm:$0xff]
        %v794 = vld [vmem:[%s5 + $0xb8] sm:$0xff]
        %v795 = vld [vmem:[%s5 + $0xc0] sm:$0xff]
        %v796 = vld [vmem:[%s5 + $0xc8] sm:$0xff]
        %v797 = vld [vmem:[%s5 + $0xd0] sm:$0xff]
        %v798 = vld [vmem:[%s5 + $0xd8] sm:$0xff]
        %v799 = vld [vmem:[%s5 + $0xe0] sm:$0xff]
        %v800 = vld [vmem:[%s5 + $0xe8] sm:$0xff]
        %v801 = vld [vmem:[%s5 + $0xf0] sm:$0xff]
        %v802 = vld [vmem:[%s5 + $0xf8] sm:$0xff]
        %v803 = vld [vmem:[%s5 + $0x100] sm:$0xff]
        %v804 = vld [vmem:[%s5 + $0x108] sm:$0xff]
        %v805 = vld [vmem:[%s5 + $0x110] sm:$0xff]
        %v806 = vld [vmem:[%s5 + $0x118] sm:$0xff]
        %v807 = vld [vmem:[%s5 + $0x120] sm:$0xff]
        %v808 = vld [vmem:[%s5 + $0x128] sm:$0xff]
        %v809 = vld [vmem:[%s5 + $0x130] sm:$0xff]
        %v810 = vld [vmem:[%s5 + $0x138] sm:$0xff]
        %v811 = vld [vmem:[%s5 + $0x140] sm:$0xff]
        %v812 = vld [vmem:[%s5 + $0x148] sm:$0xff]
        %v813 = vld [vmem:[%s5 + $0x150] sm:$0xff]
        %v814 = vld [vmem:[%s5 + $0x158] sm:$0xff]
        %v815 = vld [vmem:[%s5 + $0x160] sm:$0xff]
        %v816 = vld [vmem:[%s5 + $0x168] sm:$0xff]
        %v817 = vld [vmem:[%s5 + $0x170] sm:$0xff]
        %v818 = vld [vmem:[%s5 + $0x178] sm:$0xff]
        %v819 = vld [vmem:[%s5 + $0x180] sm:$0xff]
        %v820 = vld [vmem:[%s5 + $0x188] sm:$0xff]
        %v821 = vld [vmem:[%s5 + $0x190] sm:$0xff]
        %v822 = vld [vmem:[%s5 + $0x198] sm:$0xff]
        %v823 = vld [vmem:[%s5 + $0x1a0] sm:$0xff]
        %v824 = vld [vmem:[%s5 + $0x1a8] sm:$0xff]
        %v825 = vld [vmem:[%s5 + $0x1b0] sm:$0xff]
        %v826 = vld [vmem:[%s5 + $0x1b8] sm:$0xff]
        %v827 = vld [vmem:[%s5 + $0x1c0] sm:$0xff]
        %v828 = vld [vmem:[%s5 + $0x1c8] sm:$0xff]
        %v829 = vld [vmem:[%s5 + $0x1d0] sm:$0xff]
        %v830 = vld [vmem:[%s5 + $0x1d8] sm:$0xff]
        %v831 = vld [vmem:[%s5 + $0x1e0] sm:$0xff]
        %v832 = vld [vmem:[%s5 + $0x1e8] sm:$0xff]
        %v833 = vld [vmem:[%s5 + $0x1f0] sm:$0xff]
        %v834 = vld [vmem:[%s5 + $0x1f8] sm:$0xff]
        %v835 = vld [vmem:[%s6] sm:$0x1]
        %v837 = vlaneseq
        %v838 = vshrl.u32 %v837, 7
        %v839 = vsub.s32 0, %v838
        %v840 = vrot.slane %v835, %v839
        %842 = vmatprep.subr.mxu0 0.0
        %843 = vmatpush1.msra.mxu0 %v786
        %844 = vmatprep.subr.mxu0 0.0
        %845 = vmatpush1.msra.mxu0 %v785
        %846 = vmatprep.subr.mxu0 0.0
        %847 = vmatpush1.msra.mxu0 %v784
        %848 = vmatprep.subr.mxu0 0.0
        %849 = vmatpush1.msra.mxu0 %v783
        %850 = vmatprep.subr.mxu0 0.0
        %851 = vmatpush1.msra.mxu0 %v782
        %852 = vmatprep.subr.mxu0 0.0
        %853 = vmatpush1.msra.mxu0 %v781
        %854 = vmatprep.subr.mxu0 0.0
        %855 = vmatpush1.msra.mxu0 %v780
        %856 = vmatprep.subr.mxu0 0.0
        %857 = vmatpush1.msra.mxu0 %v779
        %858 = vmatprep.subr.mxu0 0.0
        %859 = vmatpush1.msra.mxu0 %v778
        %860 = vmatprep.subr.mxu0 0.0
        %861 = vmatpush1.msra.mxu0 %v777
        %862 = vmatprep.subr.mxu0 0.0
        %863 = vmatpush1.msra.mxu0 %v776
        %864 = vmatprep.subr.mxu0 0.0
        %865 = vmatpush1.msra.mxu0 %v775
        %866 = vmatprep.subr.mxu0 0.0
        %867 = vmatpush1.msra.mxu0 %v774
        %868 = vmatprep.subr.mxu0 0.0
        %869 = vmatpush1.msra.mxu0 %v773
        %870 = vmatprep.subr.mxu0 0.0
        %871 = vmatpush1.msra.mxu0 %v772
        %872 = vmatprep.subr.mxu0 0.0
        %873 = vmatpush1.msra.mxu0 %v771
        %874 = vmatprep.subr.mxu0 0.0
        %875 = vmatpush2.msra.mxu0 %v802
        %876 = vmatprep.subr.mxu0 0.0
        %877 = vmatpush2.msra.mxu0 %v801
        %878 = vmatprep.subr.mxu0 0.0
        %879 = vmatpush2.msra.mxu0 %v800
        %880 = vmatprep.subr.mxu0 0.0
        %881 = vmatpush2.msra.mxu0 %v799
        %882 = vmatprep.subr.mxu0 0.0
        %883 = vmatpush2.msra.mxu0 %v798
        %884 = vmatprep.subr.mxu0 0.0
        %885 = vmatpush2.msra.mxu0 %v797
        %886 = vmatprep.subr.mxu0 0.0
        %887 = vmatpush2.msra.mxu0 %v796
        %888 = vmatprep.subr.mxu0 0.0
        %889 = vmatpush2.msra.mxu0 %v795
        %890 = vmatprep.subr.mxu0 0.0
        %891 = vmatpush2.msra.mxu0 %v794
        %892 = vmatprep.subr.mxu0 0.0
        %893 = vmatpush2.msra.mxu0 %v793
        %894 = vmatprep.subr.mxu0 0.0
        %895 = vmatpush2.msra.mxu0 %v792
        %896 = vmatprep.subr.mxu0 0.0
        %897 = vmatpush2.msra.mxu0 %v791
        %898 = vmatprep.subr.mxu0 0.0
        %899 = vmatpush2.msra.mxu0 %v790
        %900 = vmatprep.subr.mxu0 0.0
        %901 = vmatpush2.msra.mxu0 %v789
        %902 = vmatprep.subr.mxu0 0.0
        %903 = vmatpush2.msra.mxu0 %v788
        %904 = vmatprep.subr.mxu0 0.0
        %905 = vmatpush2.msra.mxu0 %v787
        %906 = vmatprep.mubr.f32.mxu0 %v764
        %907 = vmatmul.mubr.f32.gmra.mxu0 %v763
        %v908 = vpop.f32.mrf.mxu0
        %v909 = vadd.f32 %v840, %v908
        %v910 = vpop.f32.mrf.mxu0
        %911 = vmatprep.mubr.f32.mxu0 %v768
        %912 = vmatmul.mubr.f32.gmra.mxu0 %v767
        %v913 = vpop.f32.mrf.mxu0
        %v914 = vadd.f32 %v840, %v913
        %v915 = vpop.f32.mrf.mxu0
        %916 = vdwg.mxu0
        %917 = vmatprep.subr.mxu0 0.0
        %918 = vmatpush1.msra.mxu0 %v818
        %919 = vmatprep.subr.mxu0 0.0
        %920 = vmatpush1.msra.mxu0 %v817
        %921 = vmatprep.subr.mxu0 0.0
        %922 = vmatpush1.msra.mxu0 %v816
        %923 = vmatprep.subr.mxu0 0.0
        %924 = vmatpush1.msra.mxu0 %v815
        %925 = vmatprep.subr.mxu0 0.0
        %926 = vmatpush1.msra.mxu0 %v814
        %927 = vmatprep.subr.mxu0 0.0
        %928 = vmatpush1.msra.mxu0 %v813
        %929 = vmatprep.subr.mxu0 0.0
        %930 = vmatpush1.msra.mxu0 %v812
        %931 = vmatprep.subr.mxu0 0.0
        %932 = vmatpush1.msra.mxu0 %v811
        %933 = vmatprep.subr.mxu0 0.0
        %934 = vmatpush1.msra.mxu0 %v810
        %935 = vmatprep.subr.mxu0 0.0
        %936 = vmatpush1.msra.mxu0 %v809
        %937 = vmatprep.subr.mxu0 0.0
        %938 = vmatpush1.msra.mxu0 %v808
        %939 = vmatprep.subr.mxu0 0.0
        %940 = vmatpush1.msra.mxu0 %v807
        %941 = vmatprep.subr.mxu0 0.0
        %942 = vmatpush1.msra.mxu0 %v806
        %943 = vmatprep.subr.mxu0 0.0
        %944 = vmatpush1.msra.mxu0 %v805
        %945 = vmatprep.subr.mxu0 0.0
        %946 = vmatpush1.msra.mxu0 %v804
        %947 = vmatprep.subr.mxu0 0.0
        %948 = vmatpush1.msra.mxu0 %v803
        %949 = vmatprep.subr.mxu0 0.0
        %950 = vmatpush2.msra.mxu0 %v834
        %951 = vmatprep.subr.mxu0 0.0
        %952 = vmatpush2.msra.mxu0 %v833
        %953 = vmatprep.subr.mxu0 0.0
        %954 = vmatpush2.msra.mxu0 %v832
        %955 = vmatprep.subr.mxu0 0.0
        %956 = vmatpush2.msra.mxu0 %v831
        %957 = vmatprep.subr.mxu0 0.0
        %958 = vmatpush2.msra.mxu0 %v830
        %959 = vmatprep.subr.mxu0 0.0
        %960 = vmatpush2.msra.mxu0 %v829
        %961 = vmatprep.subr.mxu0 0.0
        %962 = vmatpush2.msra.mxu0 %v828
        %963 = vmatprep.subr.mxu0 0.0
        %964 = vmatpush2.msra.mxu0 %v827
        %965 = vmatprep.subr.mxu0 0.0
        %966 = vmatpush2.msra.mxu0 %v826
        %967 = vmatprep.subr.mxu0 0.0
        %968 = vmatpush2.msra.mxu0 %v825
        %969 = vmatprep.subr.mxu0 0.0
        %970 = vmatpush2.msra.mxu0 %v824
        %971 = vmatprep.subr.mxu0 0.0
        %972 = vmatpush2.msra.mxu0 %v823
        %973 = vmatprep.subr.mxu0 0.0
        %974 = vmatpush2.msra.mxu0 %v822
        %975 = vmatprep.subr.mxu0 0.0
        %976 = vmatpush2.msra.mxu0 %v821
        %977 = vmatprep.subr.mxu0 0.0
        %978 = vmatpush2.msra.mxu0 %v820
        %979 = vmatprep.subr.mxu0 0.0
        %980 = vmatpush2.msra.mxu0 %v819
        %981 = vmatprep.mubr.f32.mxu0 %v766
        %982 = vmatmul.mubr.f32.gmra.mxu0 %v765
        %v983 = vpop.f32.mrf.mxu0
        %v984 = vadd.f32 %v909, %v983
        %v985 = vpop.f32.mrf.mxu0
        %986 = vmatprep.mubr.f32.mxu0 %v770
        %987 = vmatmul.mubr.f32.gmra.mxu0 %v769
        %v988 = vpop.f32.mrf.mxu0
        %v989 = vadd.f32 %v914, %v988
        %v990 = vpop.f32.mrf.mxu0
        %991 = vdwg.mxu0
        %v992 = vmax.f32 %v984, 0.0
        %v993 = vmax.f32 %v989, 0.0
        %v994 = vld [vmem:[%s7] sm:$0x1]
        %v996 = vlaneseq
        %v997 = vshrl.u32 %v996, 7
        %v998 = vsub.s32 0, %v997
        %v999 = vrot.slane %v994, %v998
        %v1001 = vmul.f32 %v992, %v999
        %v1002 = vmul.f32 %v993, %v999
        %vm1003 = vcmask 523264
        %v1004 = vsel %vm1003, %v1001, 0.0
        %1005 = vadd.xlane.f32.xlu0 %v1004
        %v1006 = vpop.xlane.xlu0 %1005
        %v1007 = vsel %vm1003, %v1002, 0.0
        %1008 = vadd.xlane.f32.xlu0 %v1007
        %v1009 = vpop.xlane.xlu0 %1008
        %v1010 = vld [vmem:[#allocation2] sm:$0x1]
        %v1012 = vlaneseq
        %v1013 = vshrl.u32 %v1012, 7
        %v1014 = vsub.s32 0, %v1013
        %v1015 = vrot.slane %v1010, %v1014
        %v1017 = vadd.f32 %v1006, %v1015
        %v1018 = vadd.f32 %v1009, %v1015
        %v1019 = vxor.u32 %v1017, 2147483648
        %v1020 = vxor.u32 %v1018, 2147483648
        %v1021 = vmul.f32 %v1019, 1.442695
        %v1022 = vpow.pop %v1021
        %v1023 = vmul.f32 %v1020, 1.442695
        %v1024 = vpow.pop %v1023
        %v1025 = vadd.f32 %v1022, 1.0
        %v1026 = vadd.f32 %v1024, 1.0
        %v1027 = vrcp.pop %v1025
        %v1028 = vmul.f32 1.0, %v1027
        %v1029 = vrcp.pop %v1026
        %v1030 = vmul.f32 1.0, %v1029
        %vm1031 = vcmask 7168
        %1032 = vst.msk [vmem:[%s351] sm:$0xff] %vm1031, %v1028
        %1033 = vst.msk [vmem:[%s351 + $0x8] sm:$0xff] %vm1031, %v1030
        %s1034 = smul.u32 2, %s23
        %p1035 = scmp.lt.s32.totalorder %s1034, 3
        %s1036 = scalar_select %p1035, %s1034, 3
        %s1037 = smul.addr %s1036, 8
        %s1038 = scalar_lea.vmem %s9, %s1037
        // Predicated region
        $region61: #{tpu_custom_call.1} parent=55 // pred_check
          %p1039 = pneg %p235
        $region62: #{tpu_custom_call.1} parent=55 // pred_check_branch
          %1041 = sbr.rel (%p1039) target = $region64
        $region63: #{tpu_custom_call.1} parent=55 // pred_region
          %s1042 = smul.u32 2, %s23
        $region64: #{tpu_custom_call.1} parent=55 // pred_fallthru
          _
      $region56: #{tpu_custom_call.1} parent=5 // pred_fallthru
        _
      %p1043 = scmp.le.s32.totalorder 2, %s18
      // Predicated region
      $region65: #{tpu_custom_call.1} parent=5 // pred_check
        %p1044 = pneg %p1043
      $region66: #{tpu_custom_call.1} parent=5 // pred_check_branch
        %1046 = sbr.rel (%p1044) target = $region68
      $region67: #{tpu_custom_call.1} parent=5 // pred_region
        %s1047 = ssub.s32 %s18, 2
        // Predicated region
        $region69: #{tpu_custom_call.1} parent=67 // pred_check
          %p1048 = pneg %p241
        $region70: #{tpu_custom_call.1} parent=67 // pred_check_branch
          %1050 = sbr.rel (%p1048) target = $region72
        $region71: #{tpu_custom_call.1} parent=67 // pred_region
          %s1051 = smul.u32 2, %s24
          %p1052 = scmp.lt.s32.totalorder %s1051, 3
          %s1053 = scalar_select %p1052, %s1051, 3
          %s1054 = smul.addr %s1053, 8
          %s1055 = scalar_lea.vmem %s9, %s1054
        $region72: #{tpu_custom_call.1} parent=67 // pred_fallthru
          _
      $region68: #{tpu_custom_call.1} parent=5 // pred_fallthru
        _
    $region6: #{tpu_custom_call.1} parent=1 // loop_footer
      %s22 = sadd.s32 1, %s18
    $region7: #{tpu_custom_call.1} parent=1 // loop_footer_branch
      %17 = sbr.rel target = $region3
    $region8: #{tpu_custom_call.1} parent=1 // loop_exit
      _
    %1056 = vsyncpa [#allocation4], 1
    %s1057 = scalar_lea.sflag [#allocation4], 1
    %1058 = vsyncpa %s1057, 1

</llo_original>
